<compile_context>
chip_gen: v5e
topology: v5e:2x2
jax: 0.10.0
libtpu: 0.0.40
codegen_flags: <defaults>
</compile_context>

<pallas_src>
import functools
import math

import numpy as np
import jax
import jax.numpy as jnp
from jax import lax
from jax.experimental import pallas as pl
from jax.experimental.pallas import tpu as pltpu


# ---------------------------------------------------------------------------
# Deterministic synthetic init of the Performer projection buffer
# (mirrors gaussian_orthogonal_random_matrix; QR done host-side with numpy).
# ---------------------------------------------------------------------------
def _orthogonal_chunk(rng, cols):
    unstructured = rng.standard_normal((cols, cols))
    q, _ = np.linalg.qr(unstructured)
    return q.T


def gaussian_orthogonal_random_matrix(nb_rows, nb_cols, scaling=0, seed=42):
    rng = np.random.default_rng(seed)
    nb_full_blocks = nb_rows // nb_cols
    blocks = [_orthogonal_chunk(rng, nb_cols) for _ in range(nb_full_blocks)]
    remaining = nb_rows - nb_full_blocks * nb_cols
    if remaining > 0:
        blocks.append(_orthogonal_chunk(rng, nb_cols)[:remaining])
    final = np.concatenate(blocks, axis=0)
    if scaling == 0:
        multiplier = np.linalg.norm(rng.standard_normal((nb_rows, nb_cols)), axis=1)
    elif scaling == 1:
        multiplier = math.sqrt(float(nb_cols)) * np.ones((nb_rows,))
    else:
        raise ValueError(f"Invalid scaling {scaling}")
    return jnp.asarray(multiplier[:, None] * final, dtype=jnp.float32)


def _choose_bh_tile(bh, seq_len, m_pad):
    """Pick how many (b, h) pairs to batch per grid step.

    Targets big MXU row-blocks (amortize per-grid-step overhead) while keeping
    the (rows x m_pad) f32 temporaries well inside VMEM (v7x budget), and keeps
    >= 2 grid blocks when possible so both v7x TensorCores get work.
    """
    vmem_rows_cap = max(seq_len, (8 * 1024 * 1024) // (16 * m_pad))
    target_rows = min(1024, vmem_rows_cap)
    tile = 1
    for cand in range(1, bh + 1):
        if bh % cand == 0 and cand * seq_len <= max(target_rows, seq_len):
            tile = cand
    while bh // tile < 2 and tile > 1:          # keep >=2 parallel blocks if possible
        cand = tile - 1
        while cand > 1 and bh % cand != 0:
            cand -= 1
        tile = cand
    return tile


# ---------------------------------------------------------------------------
# Kernel 1: per-block column maxima of the k feature logits (k @ proj^T).
# The key feature map needs the GLOBAL max over the whole k logit tensor
# (torch.max(data_dash) with no dim); the tiny cross-block combine is done in
# the wrapper. The logits themselves are NOT written to HBM.
# ---------------------------------------------------------------------------
def _kmax_kernel(k_ref, proj_ref, kmax_ref, *, nb_features):
    k = k_ref[0]                       # (R, D) raw k rows, R = bh_tile * N
    proj = proj_ref[...]               # (M_pad, D), pre-scaled by data_normalizer
    m_pad = proj.shape[0]
    kd = lax.dot_general(k, proj,
                         dimension_numbers=(((1,), (1,)), ((), ())),
                         preferred_element_type=jnp.float32)    # (R, M_pad)
    if m_pad != nb_features:           # exclude zero-padded feature columns
        col_ok = lax.broadcasted_iota(jnp.int32, (1, m_pad), 1) < nb_features
        kd = jnp.where(col_ok, kd, -jnp.inf)
    # Lane-dense (1, M_pad) partial column maxima (no masked partial store).
    kmax_ref[0] = jnp.max(kd, axis=0, keepdims=True)


# ---------------------------------------------------------------------------
# Kernel 2: softmax feature maps (recomputed q/k logits, exp, diag terms) +
# non-causal linear attention, for BH_TILE (b, h) pairs per grid step.
# ---------------------------------------------------------------------------
def _attn_kernel(gmax_ref, q_ref, k_ref, v_ref, proj_ref, out_ref, *,
                 bh_tile, seq_len, nb_features, half_dn2, ratio, eps):
    q = q_ref[0]                       # (R, D)   R = bh_tile * seq_len
    k = k_ref[0]                       # (R, D)
    v = v_ref[0]                       # (bh_tile, N, D)
    proj = proj_ref[...]               # (M_pad, D), pre-scaled by data_normalizer
    m_pad = proj.shape[0]

    # Feature logits on the MXU (k logits recomputed here instead of reloaded).
    qd = lax.dot_general(q, proj,
                         dimension_numbers=(((1,), (1,)), ((), ())),
                         preferred_element_type=jnp.float32)    # (R, M_pad)
    kd = lax.dot_general(k, proj,
                         dimension_numbers=(((1,), (1,)), ((), ())),
                         preferred_element_type=jnp.float32)    # (R, M_pad)

    col_ok = None
    if m_pad != nb_features:
        col_ok = lax.broadcasted_iota(jnp.int32, (1, m_pad), 1) < nb_features
        qd_for_max = jnp.where(col_ok, qd, -jnp.inf)
    else:
        qd_for_max = qd

    diag_q = jnp.sum(q * q, axis=-1, keepdims=True) * half_dn2  # (R, 1)
    diag_k = jnp.sum(k * k, axis=-1, keepdims=True) * half_dn2  # (R, 1)
    q_max = jnp.max(qd_for_max, axis=-1, keepdims=True)         # (R, 1) per-row max
    g_max = gmax_ref[0]                                         # global k max (SMEM)

    # softmax_kernel(q, is_query=True) / softmax_kernel(k, is_query=False)
    q_prime = ratio * (jnp.exp(qd - diag_q - q_max) + eps)      # (R, M_pad)
    k_prime = ratio * (jnp.exp(kd - diag_k - g_max) + eps)      # (R, M_pad)
    if col_ok is not None:             # zero padded feature columns AFTER exp+eps
        q_prime = jnp.where(col_ok, q_prime, 0.0)
        k_prime = jnp.where(col_ok, k_prime, 0.0)

    # Per-(b, h) linear attention. seq_len is a multiple of the sublane count
    # here, so these leading-dim splits are layout-preserving.
    qp = q_prime.reshape(bh_tile, seq_len, m_pad)
    kp = k_prime.reshape(bh_tile, seq_len, m_pad)

    k_sum = jnp.sum(kp, axis=1)                                         # (b, M_pad)
    denom = jnp.sum(qp * k_sum[:, None, :], axis=-1, keepdims=True)     # (b, N, 1)
    context = jnp.einsum('bnm,bnd->bmd', kp, v,
                         preferred_element_type=jnp.float32)            # (b, M_pad, D)
    out = jnp.einsum('bnm,bmd->bnd', qp, context,
                     preferred_element_type=jnp.float32)                # (b, N, D)
    out = out * pl.reciprocal(denom, approx=True)
    # TODO(synk): lane-dense (bh_tile, N*D) output store skipped -- the
    # minor-dim-merging reshape is kept off the kernel's hot path to stay on
    # well-supported reshape/layout paths; output block matches full (N, D).
    out_ref[0] = out.astype(out_ref.dtype)


# ---------------------------------------------------------------------------
# Module wrapper
# ---------------------------------------------------------------------------
class FastAttention:
    def __init__(self, dim_heads, nb_features=None, ortho_scaling=0):
        self.dim_heads = dim_heads
        self.nb_features = (nb_features if nb_features is not None
                            else int(dim_heads * math.log(dim_heads)))
        self.ortho_scaling = ortho_scaling
        self.projection_matrix = gaussian_orthogonal_random_matrix(
            self.nb_features, dim_heads, scaling=ortho_scaling)
        # Lane-align the feature dim (e.g. 110 -> 128) with zero rows; the
        # padded feature columns are masked out inside the kernels so the
        # semantics are unchanged. Fold data_normalizer into the projection.
        self._m_pad = ((self.nb_features + 127) // 128) * 128
        dn = float(dim_heads) ** -0.25
        proj_scaled = (dn * self.projection_matrix).astype(jnp.float32)
        if self._m_pad != self.nb_features:
            pad = jnp.zeros((self._m_pad - self.nb_features, dim_heads), jnp.float32)
            proj_scaled = jnp.concatenate([proj_scaled, pad], axis=0)
        self._proj_kernel = proj_scaled            # (M_pad, D)
        # TODO(synk): causal path (fast_transformers CUDA kernel), the
        # generalized_attention variant, the feature-redraw counter / gradient
        # hooks and a bf16-input MXU fast path are not implemented
        # (default float32 non-causal forward only).

    def __call__(self, q, k, v):
        B, H, N, D = q.shape
        assert D == self.dim_heads
        BH = B * H
        M = self.nb_features
        M_pad = self._m_pad
        proj = self._proj_kernel

        bh_tile = _choose_bh_tile(BH, N, M_pad)
        G = BH // bh_tile
        R = bh_tile * N

        compute_dtype = jnp.float32
        qf = q.reshape(G, R, D).astype(compute_dtype)
        kf = k.reshape(G, R, D).astype(compute_dtype)
        vf = v.reshape(G, bh_tile, N, D).astype(compute_dtype)

        half_dn2 = 0.5 * float(D) ** -0.5      # 0.5 * data_normalizer**2
        ratio = float(M) ** -0.5
        eps = 1e-4

        cparams = pltpu.CompilerParams(
            dimension_semantics=("parallel",),
            vmem_limit_bytes=32 * 1024 * 1024)

        # Pass 1: per-block column maxima of the k feature logits.
        kmax = pl.pallas_call(
            functools.partial(_kmax_kernel, nb_features=M),
            grid=(G,),
            in_specs=[
                pl.BlockSpec((1, R, D), lambda i: (i, 0, 0)),       # k rows
                pl.BlockSpec((M_pad, D), lambda i: (0, 0)),         # projection
            ],
            out_specs=pl.BlockSpec((1, 1, M_pad), lambda i: (i, 0, 0)),
            out_shape=jax.ShapeDtypeStruct((G, 1, M_pad), jnp.float32),
            compiler_params=cparams,
        )(kf, proj)

        # Tiny cross-block combine of the partial maxima (glue op).
        gmax = jnp.max(kmax).reshape(1).astype(jnp.float32)

        # Pass 2: feature maps + non-causal linear attention.
        out = pl.pallas_call(
            functools.partial(_attn_kernel, bh_tile=bh_tile, seq_len=N,
                              nb_features=M, half_dn2=half_dn2,
                              ratio=ratio, eps=eps),
            grid=(G,),
            in_specs=[
                pl.BlockSpec(memory_space=pltpu.MemorySpace.SMEM),       # global k max
                pl.BlockSpec((1, R, D), lambda i: (i, 0, 0)),            # q rows
                pl.BlockSpec((1, R, D), lambda i: (i, 0, 0)),            # k rows
                pl.BlockSpec((1, bh_tile, N, D), lambda i: (i, 0, 0, 0)),  # v
                pl.BlockSpec((M_pad, D), lambda i: (0, 0)),              # projection
            ],
            out_specs=pl.BlockSpec((1, bh_tile, N, D), lambda i: (i, 0, 0, 0)),
            out_shape=jax.ShapeDtypeStruct((G, bh_tile, N, D), compute_dtype),
            compiler_params=cparams,
        )(gmax, qf, kf, vf, proj)

        return out.reshape(B, H, N, D)


# ---------------------------------------------------------------------------
# Pure-JAX reference of the PyTorch forward (for correctness check).
# ---------------------------------------------------------------------------
def fast_attention_reference(q, k, v, proj):
    D = q.shape[-1]
    M = proj.shape[0]
    dn = float(D) ** -0.25
    ratio = float(M) ** -0.5
    eps = 1e-4
    qd = jnp.einsum('bhnd,md->bhnm', dn * q, proj)
    kd = jnp.einsum('bhnd,md->bhnm', dn * k, proj)
    diag_q = jnp.sum(q ** 2, -1, keepdims=True) / 2.0 * dn ** 2
    diag_k = jnp.sum(k ** 2, -1, keepdims=True) / 2.0 * dn ** 2
    qp = ratio * (jnp.exp(qd - diag_q - jnp.max(qd, -1, keepdims=True)) + eps)
    kp = ratio * (jnp.exp(kd - diag_k - jnp.max(kd)) + eps)
    d_inv = 1.0 / jnp.einsum('bhnm,bhm->bhn', qp, kp.sum(-2))
    context = jnp.einsum('bhnm,bhnd->bhmd', kp, v)
    return jnp.einsum('bhmd,bhnm,bhn->bhnd', context, qp, d_inv)


if __name__ == "__main__":
    B, H, N, D = 2, 2, 8, 32
    key = jax.random.PRNGKey(0)
    kq, kk, kv = jax.random.split(key, 3)
    q = jax.random.normal(kq, (B, H, N, D), dtype=jnp.float32)
    k = jax.random.normal(kk, (B, H, N, D), dtype=jnp.float32)
    v = jax.random.normal(kv, (B, H, N, D), dtype=jnp.float32)

    attn = FastAttention(dim_heads=D)      # nb_features = int(32*ln(32)) = 110 -> padded to 128
    out = attn(q, k, v)
    out = jax.block_until_ready(out)

    ref = fast_attention_reference(q, k, v, attn.projection_matrix)
    assert out.shape == (B, H, N, D)
    assert jnp.allclose(out, ref, rtol=2e-2, atol=2e-3), "mismatch vs reference"

    print("KERNEL_OK")
</pallas_src>

<mosaic_0001>
module attributes {stable_mosaic.version = 11 : i64} {
  func.func @_kmax_kernel(%arg0: i32, %arg1: memref<1x16x32xf32, #tpu.memory_space<vmem>>, %arg2: memref<128x32xf32, #tpu.memory_space<vmem>>, %arg3: memref<1x1x128xf32, #tpu.memory_space<vmem>>) attributes {dimension_semantics = [#tpu.dimension_semantics<parallel>], iteration_bounds = array<i64: 2>, scalar_prefetch = 0 : i64, scratch_operands = 0 : i64, tpu.core_type = #tpu.core_type<tc>, window_params = [{transform_indices = @transform_0, window_bounds = array<i64: 1, 16, 32>}, {pipeline_mode = #tpu.pipeline_mode<synchronous>, transform_indices = @transform_1, window_bounds = array<i64: 128, 32>}, {transform_indices = @transform_2, window_bounds = array<i64: 1, 1, 128>}]} {
    %c0 = arith.constant 0 : index
    %c0_0 = arith.constant 0 : index
    %c0_1 = arith.constant 0 : index
    %0 = vector.load %arg1[%c0, %c0_0, %c0_1] : memref<1x16x32xf32, #tpu.memory_space<vmem>>, vector<1x16x32xf32>
    %1 = vector.shape_cast %0 : vector<1x16x32xf32> to vector<16x32xf32>
    %c0_2 = arith.constant 0 : index
    %c0_3 = arith.constant 0 : index
    %2 = vector.load %arg2[%c0_2, %c0_3] : memref<128x32xf32, #tpu.memory_space<vmem>>, vector<128x32xf32>
    %cst = arith.constant dense<0.000000e+00> : vector<16x128xf32>
    %3 = tpu.matmul %1, %2, %cst {dimension_numbers = #tpu.dot_dimension_numbers<[1], [1], [0], [0], [0, 0, 1, 0], [], []>} : vector<16x32xf32>, vector<128x32xf32>, vector<16x128xf32> -> vector<16x128xf32>
    %4 = tpu.iota {dimensions = array<i32: 1>} : vector<1x128xi32>
    %c110_i32 = arith.constant 110 : i32
    %5 = vector.broadcast %c110_i32 : i32 to vector<1x128xi32>
    %6 = arith.cmpi slt, %4, %5 : vector<1x128xi32>
    %cst_4 = arith.constant 0xFF800000 : f32
    %7 = vector.shape_cast %6 : vector<1x128xi1> to vector<1x128xi1>
    %8 = vector.broadcast %7 : vector<1x128xi1> to vector<16x128xi1>
    %9 = vector.broadcast %cst_4 : f32 to vector<16x128xf32>
    %10 = arith.select %8, %3, %9 : vector<16x128xi1>, vector<16x128xf32>
    %cst_5 = arith.constant dense<0xFF800000> : vector<128xf32>
    %11 = vector.multi_reduction <maximumf>, %10, %cst_5 [0] : vector<16x128xf32> to vector<128xf32>
    %12 = vector.shape_cast %11 : vector<128xf32> to vector<1x128xf32>
    %c0_6 = arith.constant 0 : index
    %c0_7 = arith.constant 0 : index
    %c0_8 = arith.constant 0 : index
    %13 = vector.load %arg3[%c0_6, %c0_7, %c0_8] : memref<1x1x128xf32, #tpu.memory_space<vmem>>, vector<1x1x128xf32>
    %14 = vector.shape_cast %13 : vector<1x1x128xf32> to vector<1x128xf32>
    %15 = vector.shape_cast %12 : vector<1x128xf32> to vector<1x1x128xf32>
    tpu.vector_store %arg3[%c0_6, %c0_7, %c0_8], %15 {strides = array<i32>} : memref<1x1x128xf32, #tpu.memory_space<vmem>>, vector<1x1x128xf32>,
    return
  }
  func.func @transform_0(%arg0: i32) -> (i32, i32, i32) {
    %c0_i32 = arith.constant 0 : i32
    %c0_i32_0 = arith.constant 0 : i32
    %c0_i32_1 = arith.constant 0 : i32
    return %arg0, %c0_i32, %c0_i32_0 : i32, i32, i32
  }
  func.func @transform_1(%arg0: i32) -> (i32, i32) {
    %c0_i32 = arith.constant 0 : i32
    %c0_i32_0 = arith.constant 0 : i32
    %c0_i32_1 = arith.constant 0 : i32
    return %c0_i32, %c0_i32_0 : i32, i32
  }
  func.func @transform_2(%arg0: i32) -> (i32, i32, i32) {
    %c0_i32 = arith.constant 0 : i32
    %c0_i32_0 = arith.constant 0 : i32
    %c0_i32_1 = arith.constant 0 : i32
    return %arg0, %c0_i32, %c0_i32_0 : i32, i32, i32
  }
}

</mosaic_0001>

<llo_original>
// kernel: tpu_custom_call.1
$region0: #{tpu_custom_call.1}
  #allocation0 [shape = 'u32[]', space=smem, size = 0x4, offset = 0x4, fixed_abs, tag = 'smem constant byte address 0x4 - core index']
  #allocation1 [shape = 'u32[72,128]{1,0:T(1,128)}', space=vmem, size = 0x9000, scoped, tag = 'internal scratch']
  %s0 = inlined_call_operand.vmem [shape: f32[2,16,32], index: 0, kind: input, shape index: {}]
  %s1 = inlined_call_operand.vmem [shape: f32[128,32], index: 1, kind: input, shape index: {}]
  %s2 = inlined_call_operand.hbm [shape: f32[2,1,128], index: 2, kind: output, shape index: {}]
  %s3 = sld [smem:[#allocation0]]
  $region41: #{tpu_custom_call.1} parent=0
    _
  %s5 = ssub.s32 1, %s3
  %s6 = scalar_select 0, %s5, %s3
  $region1: #{tpu_custom_call.1} parent=0
    #allocation2 [shape = 'u8[1024]{0}', space=vmem, size = 0x400, scoped, tag = 'output window, operand 0']
    #allocation3 [shape = 's32[2]{0}', space=sflag, size = 0x8, scoped, tag = 'scoped memory for tpu_custom_call.1']
    %7 = vsyncpa [#allocation3], 0
    %s8 = scalar_lea.sflag [#allocation3], 1
    %9 = vsyncpa %s8, 0
    loop: start=0, step=1, limit=4
    $region2: #{tpu_custom_call.1} parent=1 // loop_pre_header
      _
    $region3: #{tpu_custom_call.1} parent=1 // loop_header
      %s11 = sphi 0, %s15
      %p12 = scmp.ge.s32.totalorder %s11, 4
      %s21 = sphi 0, %s23
      %s24 = sphi 0, %s21
      %s25 = sphi 0, %s24
      %s41 = sphi 0, %s25
      %s45 = sphi 0, %s45
      %s47 = sphi 0, %s45
      %s48 = sphi 0, %s47
      %s62 = sphi 0, %s48
      %s68 = sphi 0, %s70
      %s71 = sphi 0, %s68
      %s72 = sphi 0, %s71
      %s88 = sphi 0, %s72
    $region4: #{tpu_custom_call.1} parent=1 // loop_header_branch
      %14 = sbr.rel (%p12) target = $region8
    $region5: #{tpu_custom_call.1} parent=1 // loop_body
      %s16 = ssub.s32 %s11, 1
      %s17 = ssub.s32 %s11, 2
      %s18 = sadd.s32 %s11, 1
      %s19 = ssub.s32 %s11, %s18
      %p20 = scmp.eq.s32.totalorder %s19, 0
      %s22 = sadd.s32 %s21, 1
      %s23 = scalar_select %p20, %s21, %s22
      %p26 = pneg %p20
      %p27 = scmp.eq.s32.totalorder %s11, 1
      %p28 = por %p26, %p27
      %p29 = scmp.ne.s32.totalorder %s21, %s24
      %p30 = scmp.eq.s32.totalorder %s11, 0
      %p31 = por %p29, %p30
      %p32 = scmp.ne.s32.totalorder %s21, %s24
      %p33 = scmp.eq.s32.totalorder %s16, 1
      %p34 = por %p32, %p33
      %p35 = scmp.ne.s32.totalorder %s24, %s25
      %p36 = scmp.eq.s32.totalorder %s16, 0
      %p37 = por %p35, %p36
      %p38 = scmp.ne.s32.totalorder %s24, %s25
      %p39 = scmp.eq.s32.totalorder %s17, 1
      %p40 = por %p38, %p39
      %p42 = scmp.ne.s32.totalorder %s25, %s41
      %p43 = scmp.eq.s32.totalorder %s17, 0
      %p44 = por %p42, %p43
      %s46 = sadd.s32 %s45, 1
      %p49 = scmp.eq.s32.totalorder %s11, 1
      %p50 = scmp.ne.s32.totalorder %s45, %s47
      %p51 = scmp.eq.s32.totalorder %s11, 0
      %p52 = por %p50, %p51
      %p53 = scmp.ne.s32.totalorder %s45, %s47
      %p54 = scmp.eq.s32.totalorder %s16, 1
      %p55 = por %p53, %p54
      %p56 = scmp.ne.s32.totalorder %s47, %s48
      %p57 = scmp.eq.s32.totalorder %s16, 0
      %p58 = por %p56, %p57
      %p59 = scmp.ne.s32.totalorder %s47, %s48
      %p60 = scmp.eq.s32.totalorder %s17, 1
      %p61 = por %p59, %p60
      %p63 = scmp.ne.s32.totalorder %s48, %s62
      %p64 = scmp.eq.s32.totalorder %s17, 0
      %p65 = por %p63, %p64
      %s66 = ssub.s32 %s11, %s18
      %p67 = scmp.eq.s32.totalorder %s66, 0
      %s69 = sadd.s32 %s68, 1
      %s70 = scalar_select %p67, %s68, %s69
      %p73 = pneg %p67
      %p74 = scmp.eq.s32.totalorder %s11, 1
      %p75 = por %p73, %p74
      %p76 = scmp.ne.s32.totalorder %s68, %s71
      %p77 = scmp.eq.s32.totalorder %s11, 0
      %p78 = por %p76, %p77
      %p79 = scmp.ne.s32.totalorder %s68, %s71
      %p80 = scmp.eq.s32.totalorder %s16, 1
      %p81 = por %p79, %p80
      %p82 = scmp.ne.s32.totalorder %s71, %s72
      %p83 = scmp.eq.s32.totalorder %s16, 0
      %p84 = por %p82, %p83
      %p85 = scmp.ne.s32.totalorder %s71, %s72
      %p86 = scmp.eq.s32.totalorder %s17, 1
      %p87 = por %p85, %p86
      %p89 = scmp.ne.s32.totalorder %s72, %s88
      %p90 = scmp.eq.s32.totalorder %s17, 0
      %p91 = por %p89, %p90
      %p92 = scmp.le.s32.totalorder 1, %s11
      %p93 = scmp.lt.s32.totalorder %s11, 3
      %p94 = pnand %p92, %p93
      %p95 = pneg %p94
      // Predicated region
      $region9: #{tpu_custom_call.1} parent=5 // pred_check
        _
      $region10: #{tpu_custom_call.1} parent=5 // pred_check_branch
        %97 = sbr.rel (%p94) target = $region12
      $region11: #{tpu_custom_call.1} parent=5 // pred_region
        %s98 = ssub.s32 %s11, 1
        // Predicated region
        $region13: #{tpu_custom_call.1} parent=11 // pred_check
          %p99 = pneg %p58
        $region14: #{tpu_custom_call.1} parent=11 // pred_check_branch
          %101 = sbr.rel (%p99) target = $region16
        $region15: #{tpu_custom_call.1} parent=11 // pred_region
          _
        $region16: #{tpu_custom_call.1} parent=11 // pred_fallthru
          _
      $region12: #{tpu_custom_call.1} parent=5 // pred_fallthru
        _
      %p102 = scmp.lt.s32.totalorder %s11, 2
      // Predicated region
      $region17: #{tpu_custom_call.1} parent=5 // pred_check
        %p103 = pneg %p102
      $region18: #{tpu_custom_call.1} parent=5 // pred_check_branch
        %105 = sbr.rel (%p103) target = $region20
      $region19: #{tpu_custom_call.1} parent=5 // pred_region
        // Predicated region
        $region21: #{tpu_custom_call.1} parent=19 // pred_check
          %p106 = pneg %p31
        $region22: #{tpu_custom_call.1} parent=19 // pred_check_branch
          %108 = sbr.rel (%p106) target = $region24
        $region23: #{tpu_custom_call.1} parent=19 // pred_region
          %p109 = scmp.lt.s32.totalorder %s11, 1
          %s110 = scalar_select %p109, %s11, 1
          %s111 = smul.addr %s110, 2
          %s112 = smul.addr %s111, 8
          %s113 = scalar_lea.vmem %s0, %s112
        $region24: #{tpu_custom_call.1} parent=19 // pred_fallthru
          _
      $region20: #{tpu_custom_call.1} parent=5 // pred_fallthru
        _
      %p114 = scmp.le.s32.totalorder 1, %s11
      %p115 = scmp.lt.s32.totalorder %s11, 3
      %p116 = pnand %p114, %p115
      %p117 = pneg %p116
      // Predicated region
      $region25: #{tpu_custom_call.1} parent=5 // pred_check
        _
      $region26: #{tpu_custom_call.1} parent=5 // pred_check_branch
        %119 = sbr.rel (%p116) target = $region28
      $region27: #{tpu_custom_call.1} parent=5 // pred_region
        %s120 = ssub.s32 %s11, 1
        %p121 = scmp.lt.s32.totalorder %s16, 1
        %s122 = scalar_select %p121, %s16, 1
        %s123 = smul.addr %s122, 2
        %s124 = smul.addr %s123, 8
        %s125 = scalar_lea.vmem %s0, %s124
        %p126 = pneg %p37
        %p127 = pneg %p34
        %p128 = pneg %p58
        %p129 = pneg %p55
        %p130 = pneg %p84
        %p131 = pneg %p81
        %s132 = sand.u32 %s71, 1
        %s133 = scalar_lea.sflag [#allocation3], %s132
        %s134 = sand.u32 %s71, 1
        %s135 = scalar_lea.vmem [#allocation2], %s134
        %p136 = scmp.lt.s32.totalorder %s16, 1
        %s137 = scalar_select %p136, %s16, 1
        %s138 = smul.addr %s137, 2
        %s139 = smul.addr %s138, 8
        %s140 = scalar_lea.vmem %s0, %s139
        %v141 = vld [vmem:[%s140] sm:$0xff]
        %v142 = vld [vmem:[%s140 + $0x8] sm:$0xff]
        %v143 = vld [vmem:[%s1] sm:$0xff]
        %v144 = vld [vmem:[%s1 + $0x8] sm:$0xff]
        %v145 = vld [vmem:[%s1 + $0x10] sm:$0xff]
        %v146 = vld [vmem:[%s1 + $0x18] sm:$0xff]
        %v147 = vld [vmem:[%s1 + $0x20] sm:$0xff]
        %v148 = vld [vmem:[%s1 + $0x28] sm:$0xff]
        %v149 = vld [vmem:[%s1 + $0x30] sm:$0xff]
        %v150 = vld [vmem:[%s1 + $0x38] sm:$0xff]
        %v151 = vld [vmem:[%s1 + $0x40] sm:$0xff]
        %v152 = vld [vmem:[%s1 + $0x48] sm:$0xff]
        %v153 = vld [vmem:[%s1 + $0x50] sm:$0xff]
        %v154 = vld [vmem:[%s1 + $0x58] sm:$0xff]
        %v155 = vld [vmem:[%s1 + $0x60] sm:$0xff]
        %v156 = vld [vmem:[%s1 + $0x68] sm:$0xff]
        %v157 = vld [vmem:[%s1 + $0x70] sm:$0xff]
        %v158 = vld [vmem:[%s1 + $0x78] sm:$0xff]
        %vm159 = vcmask 261120
        %v161 = vsel %vm159, %v141, 0
        %v164 = vsel %vm159, %v142, 0
        %v167 = vsel %vm159, %v143, 0
        %v170 = vsel %vm159, %v144, 0
        %v173 = vsel %vm159, %v145, 0
        %v176 = vsel %vm159, %v146, 0
        %v179 = vsel %vm159, %v147, 0
        %v182 = vsel %vm159, %v148, 0
        %v185 = vsel %vm159, %v149, 0
        %v188 = vsel %vm159, %v150, 0
        %v191 = vsel %vm159, %v151, 0
        %v194 = vsel %vm159, %v152, 0
        %v197 = vsel %vm159, %v153, 0
        %v200 = vsel %vm159, %v154, 0
        %v203 = vsel %vm159, %v155, 0
        %v206 = vsel %vm159, %v156, 0
        %v209 = vsel %vm159, %v157, 0
        %v212 = vsel %vm159, %v158, 0
        %214 = vmatpush.xpose.msra.mxu0 %v212
        %215 = vmatpush.xpose.msra.mxu0 %v209
        %216 = vmatpush.xpose.msra.mxu0 %v206
        %217 = vmatpush.xpose.msra.mxu0 %v203
        %218 = vmatpush.xpose.msra.mxu0 %v200
        %219 = vmatpush.xpose.msra.mxu0 %v197
        %220 = vmatpush.xpose.msra.mxu0 %v194
        %221 = vmatpush.xpose.msra.mxu0 %v191
        %222 = vmatpush.xpose.msra.mxu0 %v188
        %223 = vmatpush.xpose.msra.mxu0 %v185
        %224 = vmatpush.xpose.msra.mxu0 %v182
        %225 = vmatpush.xpose.msra.mxu0 %v179
        %226 = vmatpush.xpose.msra.mxu0 %v176
        %227 = vmatpush.xpose.msra.mxu0 %v173
        %228 = vmatpush.xpose.msra.mxu0 %v170
        %229 = vmatpush.xpose.msra.mxu0 %v167
        %230 = vmatmul.f32.gmra.mxu0 %v161
        %v231 = vpop.f32.mrf.mxu0
        %v232 = vadd.f32 0.0, %v231
        %233 = vmatmul.f32.gmra.mxu0 %v164
        %v234 = vpop.f32.mrf.mxu0
        %v235 = vadd.f32 0.0, %v234
        %236 = vdwg.mxu0
        %v237 = vlaneseq
        %v238 = vand.u32 %v237, 127
        %vm239 = vcmp.lt.s32.totalorder %v238, 110
        %v240 = vsel %vm239, 1, 0
        %vm241 = vcmp.eq.s32.totalorder %v240, 1
        %v242 = vsel %vm241, %v232, -inf
        %v243 = vsel %vm241, %v235, -inf
        %v244 = vmax.f32 %v242, %v243
        %v245 = vrot.slane %v244, 4
        %v246 = vmax.f32 %v244, %v245
        %v247 = vrot.slane %v246, 2
        %v248 = vmax.f32 %v246, %v247
        %v249 = vrot.slane %v248, 1
        %v250 = vmax.f32 %v248, %v249
        %251 = vst [vmem:[%s135] sm:$0x1] %v250
        %s252 = sand.u32 %s71, 1
        %s253 = scalar_lea.sflag [#allocation3], %s252
        %s254 = sand.u32 %s71, 1
        %s255 = scalar_lea.vmem [#allocation2], %s254
        // Predicated region
        $region29: #{tpu_custom_call.1} parent=27 // pred_check
          %p256 = pneg %p81
        $region30: #{tpu_custom_call.1} parent=27 // pred_check_branch
          %258 = sbr.rel (%p256) target = $region32
        $region31: #{tpu_custom_call.1} parent=27 // pred_region
          %260 = vsyncadd %s253, 0
          %s261 = scalar_lea.hbm %s2, %s16
          %s263 = sshll.u32 %s255, 4
          %s264 = int_to_ptr.vmem [resolvable:$true] %s263
          %s265 = sshll.u32 %s261, 4
          %s266 = int_to_ptr.hbm [resolvable:$true] %s265
          %268 = dma.vmem_to_hbm [thread:$0]  %s264, 16, %s266, %s253
        $region32: #{tpu_custom_call.1} parent=27 // pred_fallthru
          _
      $region28: #{tpu_custom_call.1} parent=5 // pred_fallthru
        _
      %p269 = scmp.le.s32.totalorder 2, %s11
      // Predicated region
      $region33: #{tpu_custom_call.1} parent=5 // pred_check
        %p270 = pneg %p269
      $region34: #{tpu_custom_call.1} parent=5 // pred_check_branch
        %272 = sbr.rel (%p270) target = $region36
      $region35: #{tpu_custom_call.1} parent=5 // pred_region
        %s273 = ssub.s32 %s11, 2
        // Predicated region
        $region37: #{tpu_custom_call.1} parent=35 // pred_check
          %p274 = pneg %p87
        $region38: #{tpu_custom_call.1} parent=35 // pred_check_branch
          %276 = sbr.rel (%p274) target = $region40
        $region39: #{tpu_custom_call.1} parent=35 // pred_region
          %s277 = sand.u32 %s72, 1
          %s278 = scalar_lea.sflag [#allocation3], %s277
          %s279 = sand.u32 %s72, 1
          %s280 = scalar_lea.vmem [#allocation2], %s279
          %282 = dma.done %s278, 16
        $region40: #{tpu_custom_call.1} parent=35 // pred_fallthru
          _
      $region36: #{tpu_custom_call.1} parent=5 // pred_fallthru
        _
    $region6: #{tpu_custom_call.1} parent=1 // loop_footer
      %s15 = sadd.s32 1, %s11
    $region7: #{tpu_custom_call.1} parent=1 // loop_footer_branch
      %10 = sbr.rel target = $region3
    $region8: #{tpu_custom_call.1} parent=1 // loop_exit
      _
    %283 = vsyncpa [#allocation3], 1
    %s284 = scalar_lea.sflag [#allocation3], 1
    %285 = vsyncpa %s284, 1

</llo_original>
